<compile_context>
chip_gen: v7x
topology: tpu7x:2x2x1
jax: 0.10.0
libtpu: 0.0.40
codegen_flags: <defaults>
</compile_context>

<pallas_src>
import math

import jax
import jax.numpy as jnp
from jax.experimental import pallas as pl
from jax.experimental.pallas import tpu as pltpu

# Rows (sublanes) per output block in the gridded path.  512 is a multiple of
# 8/16/32 (f32/bf16/int8 sublane packing) and gives ~4 MiB f32 blocks at K=2048.
_ROW_BLOCK = 512
# Upper bound on the lane-dense slab width; above this we fall back to the
# direct (batch, layers) layout (layers is then already lane-dense enough).
_MAX_K = 16384
# Target per-output-block bytes for the fallback row-blocked path.
_TARGET_BLOCK_BYTES = 4 * 1024 * 1024


def _fill_kernel(row_ref, out_ref):
    # row_ref: (1, W) replicated source row in VMEM.
    # out_ref: (rows, W) output block in VMEM.
    # Sublane-broadcast the single row across the block and store; Pallas
    # handles the HBM writeback and masks any partial last block.
    out_ref[...] = jnp.broadcast_to(row_ref[...], out_ref.shape)


def _dense_width(layers):
    """Lane-dense slab width: multiple of 128 AND of `layers`, ~2-4K wide."""
    k = (layers * 128) // math.gcd(layers, 128)  # lcm(layers, 128)
    if k > _MAX_K:
        return None
    while k < 2048:
        k *= 2
    return k


def _pallas_rowblocked(policy, batch):
    """Fallback: direct (batch, layers) layout (used only when `layers` is so
    large/awkward that no reasonable lane-dense width exists — then the last
    dim is already >=128-ish and lane density is acceptable)."""
    layers = policy.shape[0]
    policy_2d = policy.reshape(1, layers)
    out_shape = jax.ShapeDtypeStruct((batch, layers), policy.dtype)
    itemsize = jnp.dtype(policy.dtype).itemsize
    tb = (_TARGET_BLOCK_BYTES // max(1, layers * itemsize)) // 8 * 8
    tb = max(8, min(tb, 4096))

    if batch <= tb:
        return pl.pallas_call(
            _fill_kernel,
            out_shape=out_shape,
            in_specs=[pl.BlockSpec(memory_space=pltpu.MemorySpace.VMEM)],
            out_specs=pl.BlockSpec(memory_space=pltpu.MemorySpace.VMEM),
        )(policy_2d)

    return pl.pallas_call(
        _fill_kernel,
        out_shape=out_shape,
        grid=(pl.cdiv(batch, tb),),
        in_specs=[pl.BlockSpec((1, layers), lambda i: (0, 0))],
        out_specs=pl.BlockSpec((tb, layers), lambda i: (i, 0)),
        compiler_params=pltpu.CompilerParams(
            dimension_semantics=("parallel",),
            vmem_limit_bytes=32 * 1024 * 1024),
    )(policy_2d)


def _constant_policy_pallas(policy, batch):
    """Materialize policy broadcast to (batch, layers) via a lane-dense slab."""
    layers = policy.shape[0]
    dtype = policy.dtype
    total = batch * layers

    K = _dense_width(layers)
    if K is None:
        return _pallas_rowblocked(policy, batch)

    # One lane-dense source row: policy tiled K//layers times (K % layers == 0).
    dense_row = jnp.tile(policy, K // layers).reshape(1, K)
    rows = pl.cdiv(total, K)  # slab may carry a few padding elements at the end

    if rows <= _ROW_BLOCK:
        # Small slab: single un-gridded call, whole arrays resident in VMEM
        # (<= _ROW_BLOCK * K * itemsize ~ 4 MiB f32).  No per-step loop
        # scaffolding, one DMA in, one DMA out.
        slab = pl.pallas_call(
            _fill_kernel,
            out_shape=jax.ShapeDtypeStruct((rows, K), dtype),
            in_specs=[pl.BlockSpec(memory_space=pltpu.MemorySpace.VMEM)],
            out_specs=pl.BlockSpec(memory_space=pltpu.MemorySpace.VMEM),
        )(dense_row)
    else:
        # Large slab: tile rows in _ROW_BLOCK chunks (multiple of 8 sublanes,
        # K multiple of 128 lanes -> unmasked full-vreg stores except on the
        # final partial block).  Row blocks are independent -> "parallel"
        # (lets v7x's two TensorCores split the store-bound grid).
        slab = pl.pallas_call(
            _fill_kernel,
            out_shape=jax.ShapeDtypeStruct((rows, K), dtype),
            grid=(pl.cdiv(rows, _ROW_BLOCK),),
            in_specs=[pl.BlockSpec((1, K), lambda i: (0, 0))],
            out_specs=pl.BlockSpec((_ROW_BLOCK, K), lambda i: (i, 0)),
            compiler_params=pltpu.CompilerParams(
                dimension_semantics=("parallel",),
                vmem_limit_bytes=32 * 1024 * 1024),
        )(dense_row)

    # Flat prefix of the slab is exactly policy repeated `batch` times
    # (element j == policy[j % layers] because K % layers == 0); contiguous
    # slice + reshape is layout plumbing, not compute.
    flat = slab.reshape(-1)
    if rows * K != total:
        flat = flat[:total]
    return flat.reshape(batch, layers)


def constant_policy_forward(x, policy, *, use_pallas=None):
    """Replicates ConstantPolicy.forward.

    Args:
      x: any array whose leading dim is the batch size (e.g. NCHW input).
      policy: (layers,) parameter vector.
      use_pallas: True  -> materialize via the Pallas kernel;
                  False / None -> lazy XLA broadcast (fastest: no HBM traffic,
                  fuses into the consumer).  The kernel's best case is merely
                  matching XLA's broadcast-copy at the HBM write roofline, so
                  only request it when a materialized array is truly needed.

    Returns:
      (out, '') where out has shape (batch, layers) and dtype of `policy`.
    """
    batch = x.shape[0]
    layers = policy.shape[0]

    if not use_pallas:
        return jnp.broadcast_to(policy[None, :], (batch, layers)), ''

    return _constant_policy_pallas(policy, batch), ''


if __name__ == "__main__":
    key = jax.random.PRNGKey(0)
    k_pol, k_x = jax.random.split(key)

    layers = 8
    # Deterministic "randn"-style parameter (matches torch.randn(layers)).
    policy = jax.random.normal(k_pol, (layers,), dtype=jnp.float32)

    # Small NCHW input; only the batch dim is consumed by the forward pass.
    x = jax.random.normal(k_x, (2, 4, 16, 16), dtype=jnp.float32)
    ref = jnp.broadcast_to(policy[None, :], (x.shape[0], layers))

    # 1) Pallas kernel at the small shape -> single un-gridded lane-dense call.
    out, empty_str = constant_policy_forward(x, policy, use_pallas=True)
    out = jax.block_until_ready(out)
    assert empty_str == ''
    assert out.shape == (x.shape[0], layers) and out.dtype == policy.dtype
    assert bool(jnp.array_equal(out, ref))

    # 2) Default path: lazy XLA broadcast (no kernel, no materialization).
    out_lazy, empty_lazy = constant_policy_forward(x, policy)
    out_lazy = jax.block_until_ready(out_lazy)
    assert empty_lazy == ''
    assert bool(jnp.array_equal(out_lazy, ref))

    # 3) Batch large enough to exercise the gridded lane-dense path
    #    (rows = 514 -> grid of 2 blocks, partial last block).
    big_batch = 131_072 + 333
    x_big = jnp.zeros((big_batch, 1, 1, 1), dtype=jnp.float32)
    out_big, _ = constant_policy_forward(x_big, policy, use_pallas=True)
    out_big = jax.block_until_ready(out_big)
    ref_big = jnp.broadcast_to(policy[None, :], (big_batch, layers))
    assert out_big.shape == (big_batch, layers)
    assert bool(jnp.array_equal(out_big, ref_big))

    print("KERNEL_OK")
</pallas_src>

<mosaic_0001>
module attributes {stable_mosaic.version = 11 : i64} {
  func.func @_fill_kernel(%arg0: memref<1x2048xf32, #tpu.memory_space<vmem>>, %arg1: memref<1x2048xf32, #tpu.memory_space<vmem>>) attributes {dimension_semantics = [], scalar_prefetch = 0 : i64, scratch_operands = 0 : i64, tpu.core_type = #tpu.core_type<tc>} {
    %c0 = arith.constant 0 : index
    %c0_0 = arith.constant 0 : index
    %0 = vector.load %arg0[%c0, %c0_0] : memref<1x2048xf32, #tpu.memory_space<vmem>>, vector<1x2048xf32>
    %c0_1 = arith.constant 0 : index
    %c0_2 = arith.constant 0 : index
    %1 = vector.load %arg1[%c0_1, %c0_2] : memref<1x2048xf32, #tpu.memory_space<vmem>>, vector<1x2048xf32>
    tpu.vector_store %arg1[%c0_1, %c0_2], %0 {strides = array<i32>} : memref<1x2048xf32, #tpu.memory_space<vmem>>, vector<1x2048xf32>,
    return
  }
}

</mosaic_0001>

<llo_original>
// kernel: tpu_custom_call.1
$region0: #{tpu_custom_call.1}
  #allocation0 [shape = 'u32[]', space=smem, size = 0x4, offset = 0x4, fixed_abs, tag = 'smem constant byte address 0x4 - core index']
  #allocation1 [shape = 'u32[144,128]{1,0:T(1,128)}', space=vmem, size = 0x12000, scoped, tag = 'internal scratch']
  %s0 = inlined_call_operand.hbm [shape: f32[1,2048], index: 0, kind: input, shape index: {}]
  %s1 = inlined_call_operand.hbm [shape: f32[1,2048], index: 1, kind: output, shape index: {}]
  %s2 = sld [smem:[#allocation0]]
  $region18: #{tpu_custom_call.1} parent=0
    _
  %s4 = ssub.s32 1, %s2
  %s5 = scalar_select 0, %s4, %s2
  $region1: #{tpu_custom_call.1} parent=0
    #allocation2 [shape = 'u8[8192]{0}', space=vmem, size = 0x2000, scoped, tag = 'input window, operand 0, single buffered']
    #allocation3 [shape = 's32[1]{0}', space=sflag, size = 0x4, scoped, tag = 'scoped memory for tpu_custom_call.1']
    #allocation4 [shape = 's32[1]{0}', space=sflag, size = 0x4, scoped, tag = 'scoped memory for tpu_custom_call.1']
    #allocation5 [shape = 'u8[8192]{0}', space=vmem, size = 0x2000, scoped, tag = 'output window, operand 0, single buffered']
    %6 = vsyncpa [#allocation3], 0
    %7 = vsyncpa [#allocation4], 0
    // Predicated region
    $region2: #{tpu_custom_call.1} parent=1 // pred_check
      _
    $region3: #{tpu_custom_call.1} parent=1 // pred_check_branch
      %9 = sbr.rel (0) target = $region5
    $region4: #{tpu_custom_call.1} parent=1 // pred_region
      %s11 = ssub.s32 256, 256
      %12 = vsyncadd [#allocation3], %s11
      %s14 = sshll.u32 [#allocation2], 4
      %s15 = int_to_ptr.vmem [resolvable:$true] %s14
      %17 = dma.hbm_to_vmem [thread:$0]  %s0, 256, %s15, [#allocation3]
    $region5: #{tpu_custom_call.1} parent=1 // pred_fallthru
      _
    // Predicated region
    $region6: #{tpu_custom_call.1} parent=1 // pred_check
      _
    $region7: #{tpu_custom_call.1} parent=1 // pred_check_branch
      %19 = sbr.rel (0) target = $region9
    $region8: #{tpu_custom_call.1} parent=1 // pred_region
      %20 = dma.done [#allocation3], 256
    $region9: #{tpu_custom_call.1} parent=1 // pred_fallthru
      _
    %v21 = vld [vmem:[#allocation2] sm:$0xff]
    %v22 = vld [vmem:[#allocation2 + $0x8] sm:$0xff]
    %23 = vst [vmem:[#allocation5] sm:$0xff] %v21
    %24 = vst [vmem:[#allocation5 + $0x8] sm:$0xff] %v22
    // Predicated region
    $region10: #{tpu_custom_call.1} parent=1 // pred_check
      _
    $region11: #{tpu_custom_call.1} parent=1 // pred_check_branch
      %26 = sbr.rel (0) target = $region13
    $region12: #{tpu_custom_call.1} parent=1 // pred_region
      %s28 = ssub.s32 256, 256
      %29 = vsyncadd [#allocation4], %s28
      %s31 = sshll.u32 [#allocation5], 4
      %s32 = int_to_ptr.vmem [resolvable:$true] %s31
      %34 = dma.vmem_to_hbm [thread:$0]  %s32, 256, %s1, [#allocation4]
    $region13: #{tpu_custom_call.1} parent=1 // pred_fallthru
      _
    // Predicated region
    $region14: #{tpu_custom_call.1} parent=1 // pred_check
      _
    $region15: #{tpu_custom_call.1} parent=1 // pred_check_branch
      %36 = sbr.rel (0) target = $region17
    $region16: #{tpu_custom_call.1} parent=1 // pred_region
      %37 = dma.done [#allocation4], 256
    $region17: #{tpu_custom_call.1} parent=1 // pred_fallthru
      _
    %38 = vsyncpa [#allocation3], 1
    %39 = vsyncpa [#allocation4], 1

</llo_original>
